<compile_context>
chip_gen: v7x
topology: tpu7x:2x2x1
jax: 0.10.0
libtpu: 0.0.40
codegen_flags: <defaults>
</compile_context>

<pallas_src>
import functools

import jax
import jax.numpy as jnp
from jax.experimental import pallas as pl
from jax.experimental.pallas import tpu as pltpu


def _round_up(x, m):
    return ((x + m - 1) // m) * m


def _sigmoid(z, approx):
    if approx:
        # exp + reciprocal both route to the (idle) EUP slot: no VALU divide.
        return pl.reciprocal(1.0 + jnp.exp(-z), approx=True)
    return jax.nn.sigmoid(z)


def mlp_kernel(x_ref, w1_ref, b1_ref, w2_ref, b2_ref, wf_ref, bf_ref,
               embs_ref, tail_ref, *, approx_sigmoid):
    # fc1 + sigmoid (MXU accumulates in f32; activations stay f32)
    z1 = (jnp.dot(x_ref[...], w1_ref[...], preferred_element_type=jnp.float32)
          + b1_ref[...])
    h1 = _sigmoid(z1, approx_sigmoid)
    # fc2 + sigmoid -> embeddings (kept in f32 for the stores)
    z2 = (jnp.dot(h1.astype(w2_ref.dtype), w2_ref[...],
                  preferred_element_type=jnp.float32)
          + b2_ref[...])
    h2 = _sigmoid(z2, approx_sigmoid)
    # fused [prototype_layer | fc_last]: single MXU dot of width C+1
    tail = (jnp.dot(h2.astype(wf_ref.dtype), wf_ref[...],
                    preferred_element_type=jnp.float32)
            + bf_ref[...])
    # Two direct full-ref stores: no in-kernel lane concatenation / relayout.
    embs_ref[...] = h2.astype(embs_ref.dtype)
    tail_ref[...] = tail.astype(tail_ref.dtype)


def pack_params(params, *, input_dtype=jnp.bfloat16):
    """One-time packing: fuse prototype_layer + fc_last and cast weights.

    Hoisted out of the per-forward path (called once, reused every step).
    """
    w1, b1, w2, b2, wp, wl, bl = params
    C = wp.shape[1]
    wf = jnp.concatenate([wp, wl], axis=1)                          # (E, C+1)
    bf = jnp.concatenate([jnp.zeros((1, C), jnp.float32),
                          bl.astype(jnp.float32)], axis=1)          # (1, C+1)
    return (w1.astype(input_dtype), b1.astype(jnp.float32),
            w2.astype(input_dtype), b2.astype(jnp.float32),
            wf.astype(input_dtype), bf)


def mlp_forward(x, packed, *, tm=4096, out_dtype=jnp.float32,
                approx_sigmoid=None):
    """MLP forward pass. Returns (x_last, proto_scores, embs)."""
    w1, b1, w2, b2, wf, bf = packed
    M, F = x.shape
    H = w1.shape[1]          # embed_dim * 2
    E = w2.shape[1]          # embed_dim
    Cp1 = wf.shape[1]        # num_clusters + 1

    in_dtype = w1.dtype
    in_itemsize = jnp.dtype(in_dtype).itemsize
    out_itemsize = jnp.dtype(out_dtype).itemsize
    if approx_sigmoid is None:
        # bf16 path already has ~1e-3 numerics; f32 path stays exact.
        approx_sigmoid = in_itemsize < 4

    xk = x.astype(in_dtype)

    # Row tile: as large as possible (amortize ~0.35us/step), sublane-aligned
    # for the input dtype (16 for bf16, 8 for f32), capped at half the batch so
    # v7x's two TensorCores both get grid steps when the batch allows.
    sub = 16 if in_itemsize < 4 else 8
    half = _round_up(pl.cdiv(M, 2), sub)
    tm_eff = max(sub, min(tm, half, _round_up(M, sub)))
    grid = (pl.cdiv(M, tm_eff),)   # ragged last block handled by Pallas; no pad

    cost = pl.CostEstimate(
        flops=2 * M * (F * H + H * E + E * Cp1),
        transcendentals=M * (H + E),
        bytes_accessed=(M * F * in_itemsize                       # x
                        + (F * H + H * E + E * Cp1) * in_itemsize  # weights
                        + (H + E + Cp1) * 4                        # biases
                        + M * (E + Cp1) * out_itemsize),           # outputs
    )

    full = lambda r, c: pl.BlockSpec((r, c), lambda i: (0, 0))

    embs, tail = pl.pallas_call(
        functools.partial(mlp_kernel, approx_sigmoid=approx_sigmoid),
        out_shape=(jax.ShapeDtypeStruct((M, E), out_dtype),
                   jax.ShapeDtypeStruct((M, Cp1), out_dtype)),
        grid_spec=pltpu.PrefetchScalarGridSpec(
            num_scalar_prefetch=0,
            grid=grid,
            in_specs=[
                pl.BlockSpec((tm_eff, F), lambda i: (i, 0)),   # x row tile
                full(F, H),        # w1 (resident across grid)
                full(1, H),        # b1
                full(H, E),        # w2
                full(1, E),        # b2
                full(E, Cp1),      # fused [wp | wl]
                full(1, Cp1),      # fused [0  | bl]
            ],
            out_specs=[
                pl.BlockSpec((tm_eff, E), lambda i: (i, 0)),     # embs
                pl.BlockSpec((tm_eff, Cp1), lambda i: (i, 0)),   # [proto | last]
            ],
        ),
        compiler_params=pltpu.CompilerParams(
            dimension_semantics=("parallel",),
            # Double-buffered working set is a few MiB even at tm=8192;
            # 32 MiB keeps headroom under v7x's 64 MiB physical VMEM.
            vmem_limit_bytes=32 * 1024 * 1024,
        ),
        cost_estimate=cost,
    )(xk, w1, b1, w2, b2, wf, bf)

    C = Cp1 - 1
    proto_scores = tail[:, :C]
    x_last = tail[:, C:C + 1]
    return x_last, proto_scores, embs


def init_params(key, feature_dim, embed_dim, num_clusters):
    """Deterministic init matching _init_weights: N(0, 0.01) weights, zero biases."""
    k1, k2, k3, k4 = jax.random.split(key, 4)
    std = 0.01
    w1 = std * jax.random.normal(k1, (feature_dim, embed_dim * 2), jnp.float32)
    b1 = jnp.zeros((1, embed_dim * 2), jnp.float32)
    w2 = std * jax.random.normal(k2, (embed_dim * 2, embed_dim), jnp.float32)
    b2 = jnp.zeros((1, embed_dim), jnp.float32)
    wp = std * jax.random.normal(k3, (embed_dim, num_clusters), jnp.float32)
    wl = std * jax.random.normal(k4, (embed_dim, 1), jnp.float32)
    bl = jnp.zeros((1, 1), jnp.float32)
    return (w1, b1, w2, b2, wp, wl, bl)


if __name__ == "__main__":
    # opt.feature_dim=32, opt.embed_dim=16, num_clusters=8, opt.time_loss=True
    feature_dim, embed_dim, num_clusters = 32, 16, 8
    batch = 16

    key = jax.random.PRNGKey(0)
    kx, kp = jax.random.split(key)
    x = jax.random.normal(kx, (batch, feature_dim), jnp.float32)
    params = init_params(kp, feature_dim, embed_dim, num_clusters)

    # Pre-pack once (fusion + dtype casts hoisted off the forward path).
    packed_bf16 = pack_params(params, input_dtype=jnp.bfloat16)
    packed_f32 = pack_params(params, input_dtype=jnp.float32)

    x_last, proto_scores, embs = mlp_forward(x, packed_bf16)
    jax.block_until_ready((x_last, proto_scores, embs))

    # Reference in plain JAX (f32).
    w1, b1, w2, b2, wp, wl, bl = params
    h1 = jax.nn.sigmoid(x @ w1 + b1)
    h2 = jax.nn.sigmoid(h1 @ w2 + b2)
    ref = (h2 @ wl + bl, h2 @ wp, h2)

    # bf16 MXU inputs + approx-reciprocal sigmoid => loose tolerance.
    for got, want in zip((x_last, proto_scores, embs), ref):
        assert got.shape == want.shape, "shape mismatch vs reference"
        assert jnp.allclose(got, want, atol=3e-3), "bf16 path mismatch vs reference"

    # Pure-f32 path (exact sigmoid): tight tolerance.
    x32, p32, e32 = mlp_forward(x, packed_f32, approx_sigmoid=False)
    jax.block_until_ready((x32, p32, e32))
    for got, want in zip((x32, p32, e32), ref):
        assert jnp.allclose(got, want, atol=1e-5), "f32 path mismatch vs reference"

    print("KERNEL_OK")
</pallas_src>

<mosaic_0001>
module attributes {stable_mosaic.version = 11 : i64} {
  func.func @mlp_kernel(%arg0: i32, %arg1: memref<16x32xbf16, #tpu.memory_space<vmem>>, %arg2: memref<32x32xbf16, #tpu.memory_space<vmem>>, %arg3: memref<1x32xf32, #tpu.memory_space<vmem>>, %arg4: memref<32x16xbf16, #tpu.memory_space<vmem>>, %arg5: memref<1x16xf32, #tpu.memory_space<vmem>>, %arg6: memref<16x9xbf16, #tpu.memory_space<vmem>>, %arg7: memref<1x9xf32, #tpu.memory_space<vmem>>, %arg8: memref<16x16xf32, #tpu.memory_space<vmem>>, %arg9: memref<16x9xf32, #tpu.memory_space<vmem>>) attributes {dimension_semantics = [#tpu.dimension_semantics<parallel>], iteration_bounds = array<i64: 1>, scalar_prefetch = 0 : i64, scratch_operands = 0 : i64, tpu.core_type = #tpu.core_type<tc>, window_params = [{transform_indices = @transform_0, window_bounds = array<i64: 16, 32>}, {pipeline_mode = #tpu.pipeline_mode<synchronous>, transform_indices = @transform_1, window_bounds = array<i64: 32, 32>}, {pipeline_mode = #tpu.pipeline_mode<synchronous>, transform_indices = @transform_2, window_bounds = array<i64: 1, 32>}, {pipeline_mode = #tpu.pipeline_mode<synchronous>, transform_indices = @transform_3, window_bounds = array<i64: 32, 16>}, {pipeline_mode = #tpu.pipeline_mode<synchronous>, transform_indices = @transform_4, window_bounds = array<i64: 1, 16>}, {pipeline_mode = #tpu.pipeline_mode<synchronous>, transform_indices = @transform_5, window_bounds = array<i64: 16, 9>}, {pipeline_mode = #tpu.pipeline_mode<synchronous>, transform_indices = @transform_6, window_bounds = array<i64: 1, 9>}, {transform_indices = @transform_7, window_bounds = array<i64: 16, 16>}, {transform_indices = @transform_8, window_bounds = array<i64: 16, 9>}]} {
    %c0 = arith.constant 0 : index
    %c0_0 = arith.constant 0 : index
    %0 = vector.load %arg1[%c0, %c0_0] : memref<16x32xbf16, #tpu.memory_space<vmem>>, vector<16x32xbf16>
    %c0_1 = arith.constant 0 : index
    %c0_2 = arith.constant 0 : index
    %1 = vector.load %arg2[%c0_1, %c0_2] : memref<32x32xbf16, #tpu.memory_space<vmem>>, vector<32x32xbf16>
    %cst = arith.constant dense<0.000000e+00> : vector<16x32xf32>
    %2 = tpu.matmul %0, %1, %cst {dimension_numbers = #tpu.dot_dimension_numbers<[1], [0], [0], [1], [0, 0, 1, 1], [], []>} : vector<16x32xbf16>, vector<32x32xbf16>, vector<16x32xf32> -> vector<16x32xf32>
    %c0_3 = arith.constant 0 : index
    %c0_4 = arith.constant 0 : index
    %3 = vector.load %arg3[%c0_3, %c0_4] : memref<1x32xf32, #tpu.memory_space<vmem>>, vector<1x32xf32>
    %4 = vector.broadcast %3 : vector<1x32xf32> to vector<16x32xf32>
    %5 = arith.addf %2, %4 : vector<16x32xf32>
    %cst_5 = arith.constant 0.000000e+00 : f32
    %6 = vector.broadcast %cst_5 : f32 to vector<16x32xf32>
    %7 = arith.subf %6, %5 : vector<16x32xf32>
    %8 = math.exp %7 : vector<16x32xf32>
    %cst_6 = arith.constant 1.000000e+00 : f32
    %9 = vector.broadcast %cst_6 : f32 to vector<16x32xf32>
    %10 = arith.addf %9, %8 : vector<16x32xf32>
    %11 = tpu.reciprocal %10 {approx = true} : vector<16x32xf32> -> vector<16x32xf32>
    %12 = arith.truncf %11 : vector<16x32xf32> to vector<16x32xbf16>
    %c0_7 = arith.constant 0 : index
    %c0_8 = arith.constant 0 : index
    %13 = vector.load %arg4[%c0_7, %c0_8] : memref<32x16xbf16, #tpu.memory_space<vmem>>, vector<32x16xbf16>
    %cst_9 = arith.constant dense<0.000000e+00> : vector<16x16xf32>
    %14 = tpu.matmul %12, %13, %cst_9 {dimension_numbers = #tpu.dot_dimension_numbers<[1], [0], [0], [1], [0, 0, 1, 1], [], []>} : vector<16x32xbf16>, vector<32x16xbf16>, vector<16x16xf32> -> vector<16x16xf32>
    %c0_10 = arith.constant 0 : index
    %c0_11 = arith.constant 0 : index
    %15 = vector.load %arg5[%c0_10, %c0_11] : memref<1x16xf32, #tpu.memory_space<vmem>>, vector<1x16xf32>
    %16 = vector.broadcast %15 : vector<1x16xf32> to vector<16x16xf32>
    %17 = arith.addf %14, %16 : vector<16x16xf32>
    %cst_12 = arith.constant 0.000000e+00 : f32
    %18 = vector.broadcast %cst_12 : f32 to vector<16x16xf32>
    %19 = arith.subf %18, %17 : vector<16x16xf32>
    %20 = math.exp %19 : vector<16x16xf32>
    %cst_13 = arith.constant 1.000000e+00 : f32
    %21 = vector.broadcast %cst_13 : f32 to vector<16x16xf32>
    %22 = arith.addf %21, %20 : vector<16x16xf32>
    %23 = tpu.reciprocal %22 {approx = true} : vector<16x16xf32> -> vector<16x16xf32>
    %24 = arith.truncf %23 : vector<16x16xf32> to vector<16x16xbf16>
    %c0_14 = arith.constant 0 : index
    %c0_15 = arith.constant 0 : index
    %25 = vector.load %arg6[%c0_14, %c0_15] : memref<16x9xbf16, #tpu.memory_space<vmem>>, vector<16x9xbf16>
    %cst_16 = arith.constant dense<0.000000e+00> : vector<16x9xf32>
    %26 = tpu.matmul %24, %25, %cst_16 {dimension_numbers = #tpu.dot_dimension_numbers<[1], [0], [0], [1], [0, 0, 1, 1], [], []>} : vector<16x16xbf16>, vector<16x9xbf16>, vector<16x9xf32> -> vector<16x9xf32>
    %c0_17 = arith.constant 0 : index
    %c0_18 = arith.constant 0 : index
    %27 = vector.load %arg7[%c0_17, %c0_18] : memref<1x9xf32, #tpu.memory_space<vmem>>, vector<1x9xf32>
    %28 = vector.broadcast %27 : vector<1x9xf32> to vector<16x9xf32>
    %29 = arith.addf %26, %28 : vector<16x9xf32>
    %c0_19 = arith.constant 0 : index
    %c0_20 = arith.constant 0 : index
    %30 = vector.load %arg8[%c0_19, %c0_20] : memref<16x16xf32, #tpu.memory_space<vmem>>, vector<16x16xf32>
    tpu.vector_store %arg8[%c0_19, %c0_20], %23 {strides = array<i32>} : memref<16x16xf32, #tpu.memory_space<vmem>>, vector<16x16xf32>,
    %c0_21 = arith.constant 0 : index
    %c0_22 = arith.constant 0 : index
    %31 = vector.load %arg9[%c0_21, %c0_22] : memref<16x9xf32, #tpu.memory_space<vmem>>, vector<16x9xf32>
    tpu.vector_store %arg9[%c0_21, %c0_22], %29 {strides = array<i32>} : memref<16x9xf32, #tpu.memory_space<vmem>>, vector<16x9xf32>,
    return
  }
  func.func @transform_0(%arg0: i32) -> (i32, i32) {
    %c0_i32 = arith.constant 0 : i32
    %c0_i32_0 = arith.constant 0 : i32
    return %arg0, %c0_i32 : i32, i32
  }
  func.func @transform_1(%arg0: i32) -> (i32, i32) {
    %c0_i32 = arith.constant 0 : i32
    %c0_i32_0 = arith.constant 0 : i32
    %c0_i32_1 = arith.constant 0 : i32
    return %c0_i32, %c0_i32_0 : i32, i32
  }
  func.func @transform_2(%arg0: i32) -> (i32, i32) {
    %c0_i32 = arith.constant 0 : i32
    %c0_i32_0 = arith.constant 0 : i32
    %c0_i32_1 = arith.constant 0 : i32
    return %c0_i32, %c0_i32_0 : i32, i32
  }
  func.func @transform_3(%arg0: i32) -> (i32, i32) {
    %c0_i32 = arith.constant 0 : i32
    %c0_i32_0 = arith.constant 0 : i32
    %c0_i32_1 = arith.constant 0 : i32
    return %c0_i32, %c0_i32_0 : i32, i32
  }
  func.func @transform_4(%arg0: i32) -> (i32, i32) {
    %c0_i32 = arith.constant 0 : i32
    %c0_i32_0 = arith.constant 0 : i32
    %c0_i32_1 = arith.constant 0 : i32
    return %c0_i32, %c0_i32_0 : i32, i32
  }
  func.func @transform_5(%arg0: i32) -> (i32, i32) {
    %c0_i32 = arith.constant 0 : i32
    %c0_i32_0 = arith.constant 0 : i32
    %c0_i32_1 = arith.constant 0 : i32
    return %c0_i32, %c0_i32_0 : i32, i32
  }
  func.func @transform_6(%arg0: i32) -> (i32, i32) {
    %c0_i32 = arith.constant 0 : i32
    %c0_i32_0 = arith.constant 0 : i32
    %c0_i32_1 = arith.constant 0 : i32
    return %c0_i32, %c0_i32_0 : i32, i32
  }
  func.func @transform_7(%arg0: i32) -> (i32, i32) {
    %c0_i32 = arith.constant 0 : i32
    %c0_i32_0 = arith.constant 0 : i32
    return %arg0, %c0_i32 : i32, i32
  }
  func.func @transform_8(%arg0: i32) -> (i32, i32) {
    %c0_i32 = arith.constant 0 : i32
    %c0_i32_0 = arith.constant 0 : i32
    return %arg0, %c0_i32 : i32, i32
  }
}

</mosaic_0001>

<llo_original>
// kernel: tpu_custom_call.1
$region0: #{tpu_custom_call.1}
  #allocation0 [shape = 'u32[]', space=smem, size = 0x4, offset = 0x4, fixed_abs, tag = 'smem constant byte address 0x4 - core index']
  #allocation1 [shape = 'u32[144,128]{1,0:T(1,128)}', space=vmem, size = 0x12000, scoped, tag = 'internal scratch']
  %s0 = inlined_call_operand.vmem [shape: bf16[16,32], index: 0, kind: input, shape index: {}]
  %s1 = inlined_call_operand.vmem [shape: bf16[32,32], index: 1, kind: input, shape index: {}]
  %s2 = inlined_call_operand.vmem [shape: f32[1,32], index: 2, kind: input, shape index: {}]
  %s3 = inlined_call_operand.vmem [shape: bf16[32,16], index: 3, kind: input, shape index: {}]
  %s4 = inlined_call_operand.vmem [shape: f32[1,16], index: 4, kind: input, shape index: {}]
  %s5 = inlined_call_operand.vmem [shape: bf16[16,9], index: 5, kind: input, shape index: {}]
  %s6 = inlined_call_operand.vmem [shape: f32[1,9], index: 6, kind: input, shape index: {}]
  %s7 = inlined_call_operand.hbm [shape: f32[16,16], index: 7, kind: output, shape index: {0}]
  %s8 = inlined_call_operand.hbm [shape: f32[16,9], index: 8, kind: output, shape index: {1}]
  %9 = xla_tuple %s7, %s8
  %s10 = sld [smem:[#allocation0]]
  $region46: #{tpu_custom_call.1} parent=0
    _
  %s12 = ssub.s32 1, %s10
  %s13 = scalar_select 0, %s12, %s10
  $region1: #{tpu_custom_call.1} parent=0
    #allocation2 [shape = 'u8[8192]{0}', space=vmem, size = 0x2000, scoped, tag = 'output window, operand 0, single buffered']
    #allocation3 [shape = 's32[1]{0}', space=sflag, size = 0x4, scoped, tag = 'scoped memory for tpu_custom_call.1']
    #allocation4 [shape = 'u8[8192]{0}', space=vmem, size = 0x2000, scoped, tag = 'output window, operand 1, single buffered']
    #allocation5 [shape = 's32[1]{0}', space=sflag, size = 0x4, scoped, tag = 'scoped memory for tpu_custom_call.1']
    %14 = vsyncpa [#allocation3], 0
    %15 = vsyncpa [#allocation5], 0
    // Predicated region
    $region2: #{tpu_custom_call.1} parent=1 // pred_check
      _
    $region3: #{tpu_custom_call.1} parent=1 // pred_check_branch
      %17 = sbr.rel (0) target = $region5
    $region4: #{tpu_custom_call.1} parent=1 // pred_region
      _
    $region5: #{tpu_custom_call.1} parent=1 // pred_fallthru
      _
    // Predicated region
    $region6: #{tpu_custom_call.1} parent=1 // pred_check
      _
    $region7: #{tpu_custom_call.1} parent=1 // pred_check_branch
      %19 = sbr.rel (0) target = $region9
    $region8: #{tpu_custom_call.1} parent=1 // pred_region
      _
    $region9: #{tpu_custom_call.1} parent=1 // pred_fallthru
      _
    // Predicated region
    $region10: #{tpu_custom_call.1} parent=1 // pred_check
      _
    $region11: #{tpu_custom_call.1} parent=1 // pred_check_branch
      %21 = sbr.rel (0) target = $region13
    $region12: #{tpu_custom_call.1} parent=1 // pred_region
      _
    $region13: #{tpu_custom_call.1} parent=1 // pred_fallthru
      _
    // Predicated region
    $region14: #{tpu_custom_call.1} parent=1 // pred_check
      _
    $region15: #{tpu_custom_call.1} parent=1 // pred_check_branch
      %23 = sbr.rel (0) target = $region17
    $region16: #{tpu_custom_call.1} parent=1 // pred_region
      _
    $region17: #{tpu_custom_call.1} parent=1 // pred_fallthru
      _
    // Predicated region
    $region18: #{tpu_custom_call.1} parent=1 // pred_check
      _
    $region19: #{tpu_custom_call.1} parent=1 // pred_check_branch
      %25 = sbr.rel (0) target = $region21
    $region20: #{tpu_custom_call.1} parent=1 // pred_region
      _
    $region21: #{tpu_custom_call.1} parent=1 // pred_fallthru
      _
    // Predicated region
    $region22: #{tpu_custom_call.1} parent=1 // pred_check
      _
    $region23: #{tpu_custom_call.1} parent=1 // pred_check_branch
      %27 = sbr.rel (0) target = $region25
    $region24: #{tpu_custom_call.1} parent=1 // pred_region
      _
    $region25: #{tpu_custom_call.1} parent=1 // pred_fallthru
      _
    // Predicated region
    $region26: #{tpu_custom_call.1} parent=1 // pred_check
      _
    $region27: #{tpu_custom_call.1} parent=1 // pred_check_branch
      %29 = sbr.rel (0) target = $region29
    $region28: #{tpu_custom_call.1} parent=1 // pred_region
      _
    $region29: #{tpu_custom_call.1} parent=1 // pred_fallthru
      _
    %v31 = vld [vmem:[%s0] sm:$0xf]
    %v32 = vld [vmem:[%s0 + $0x4] sm:$0xf]
    %v33 = vld [vmem:[%s1] sm:$0xf]
    %v34 = vld [vmem:[%s1 + $0x4] sm:$0xf]
    %v35 = vld [vmem:[%s1 + $0x8] sm:$0xf]
    %v36 = vld [vmem:[%s1 + $0xc] sm:$0xf]
    %v37 = vld [vmem:[%s2] sm:$0x1]
    %v39 = vlaneseq
    %v40 = vshrl.u32 %v39, 7
    %v41 = vsub.s32 0, %v40
    %v42 = vrot.slane %v37, %v41
    %v46 = vunpack.c.l.b16 %v31
    %v47 = vunpack.c.l.b16 %v32
    %v48 = vpack.c.b16 %v47, %v46
    %v53 = vunpack.c.l.b16 %v33
    %v54 = vunpack.c.l.b16 %v34
    %v55 = vunpack.c.l.b16 %v35
    %v56 = vunpack.c.l.b16 %v36
    %v57 = vpack.c.b16 %v54, %v53
    %v58 = vpack.c.b16 %v56, %v55
    %vm61 = vcmask 261120
    %v63 = vsel %vm61, %v48, 0
    %65 = vmatprep.subr.bf16.mxu0 0
    %66 = vmatpush1.bf16.msra.mxu0 %v57
    %67 = vmatprep.subr.bf16.mxu0 0
    %68 = vmatpush1.bf16.msra.mxu0 %v58
    %69 = vmatprep.subr.bf16.mxu0 0
    %70 = vmatpush1.bf16.msra.mxu0 0
    %71 = vmatprep.subr.bf16.mxu0 0
    %72 = vmatpush1.bf16.msra.mxu0 0
    %73 = vmatprep.subr.bf16.mxu0 0
    %74 = vmatpush1.bf16.msra.mxu0 0
    %75 = vmatprep.subr.bf16.mxu0 0
    %76 = vmatpush1.bf16.msra.mxu0 0
    %77 = vmatprep.subr.bf16.mxu0 0
    %78 = vmatpush1.bf16.msra.mxu0 0
    %79 = vmatprep.subr.bf16.mxu0 0
    %80 = vmatpush1.bf16.msra.mxu0 0
    %81 = vmatprep.subr.bf16.mxu0 0
    %82 = vmatpush1.bf16.msra.mxu0 0
    %83 = vmatprep.subr.bf16.mxu0 0
    %84 = vmatpush1.bf16.msra.mxu0 0
    %85 = vmatprep.subr.bf16.mxu0 0
    %86 = vmatpush1.bf16.msra.mxu0 0
    %87 = vmatprep.subr.bf16.mxu0 0
    %88 = vmatpush1.bf16.msra.mxu0 0
    %89 = vmatprep.subr.bf16.mxu0 0
    %90 = vmatpush1.bf16.msra.mxu0 0
    %91 = vmatprep.subr.bf16.mxu0 0
    %92 = vmatpush1.bf16.msra.mxu0 0
    %93 = vmatprep.subr.bf16.mxu0 0
    %94 = vmatpush1.bf16.msra.mxu0 0
    %95 = vmatprep.subr.bf16.mxu0 0
    %96 = vmatpush1.bf16.msra.mxu0 0
    %97 = vmatprep.mubr.bf16.mxu0 0
    %98 = vmatmul.mubr.bf16.gmra.mrb[0].mxu0 %v63
    %v99 = vpop.f32.mrb[0].mxu0
    %v100 = vadd.f32 %v42, %v99
    %v101 = vpop.f32.mrb[0].mxu0
    %v102 = vpop.f32.mrb[0].mxu0
    %v103 = vadd.f32 %v42, %v102
    %v104 = vpop.f32.mrb[0].mxu0
    %105 = vdwg.mxu0
    %v106 = vsub.f32 0.0, %v100
    %v107 = vsub.f32 0.0, %v103
    %v108 = vmul.f32 %v106, 1.442695
    %v109 = vpow.pop %v108
    %v110 = vmul.f32 %v107, 1.442695
    %v111 = vpow.pop %v110
    %v112 = vadd.f32 %v109, 1.0
    %v113 = vadd.f32 %v111, 1.0
    %v114 = vrcp.pop %v112
    %v115 = vrcp.pop %v113
    %v116 = vpack.c.bf16 %v115, %v114
    %v117 = vld [vmem:[%s3] sm:$0xf]
    %v118 = vld [vmem:[%s3 + $0x4] sm:$0xf]
    %v119 = vld [vmem:[%s3 + $0x8] sm:$0xf]
    %v120 = vld [vmem:[%s3 + $0xc] sm:$0xf]
    %v121 = vld [vmem:[%s4] sm:$0x1]
    %v123 = vlaneseq
    %v124 = vshrl.u32 %v123, 7
    %v125 = vsub.s32 0, %v124
    %v126 = vrot.slane %v121, %v125
    %v132 = vunpack.c.l.b16 %v117
    %v133 = vunpack.c.l.b16 %v118
    %v134 = vunpack.c.l.b16 %v119
    %v135 = vunpack.c.l.b16 %v120
    %v136 = vpack.c.b16 %v133, %v132
    %v137 = vpack.c.b16 %v135, %v134
    %v141 = vsel %vm61, %v116, 0
    %143 = vmatprep.subr.bf16.mxu0 0
    %144 = vmatpush1.bf16.msra.mxu0 %v136
    %145 = vmatprep.subr.bf16.mxu0 0
    %146 = vmatpush1.bf16.msra.mxu0 %v137
    %147 = vmatprep.subr.bf16.mxu0 0
    %148 = vmatpush1.bf16.msra.mxu0 0
    %149 = vmatprep.subr.bf16.mxu0 0
    %150 = vmatpush1.bf16.msra.mxu0 0
    %151 = vmatprep.subr.bf16.mxu0 0
    %152 = vmatpush1.bf16.msra.mxu0 0
    %153 = vmatprep.subr.bf16.mxu0 0
    %154 = vmatpush1.bf16.msra.mxu0 0
    %155 = vmatprep.subr.bf16.mxu0 0
    %156 = vmatpush1.bf16.msra.mxu0 0
    %157 = vmatprep.subr.bf16.mxu0 0
    %158 = vmatpush1.bf16.msra.mxu0 0
    %159 = vmatprep.subr.bf16.mxu0 0
    %160 = vmatpush1.bf16.msra.mxu0 0
    %161 = vmatprep.subr.bf16.mxu0 0
    %162 = vmatpush1.bf16.msra.mxu0 0
    %163 = vmatprep.subr.bf16.mxu0 0
    %164 = vmatpush1.bf16.msra.mxu0 0
    %165 = vmatprep.subr.bf16.mxu0 0
    %166 = vmatpush1.bf16.msra.mxu0 0
    %167 = vmatprep.subr.bf16.mxu0 0
    %168 = vmatpush1.bf16.msra.mxu0 0
    %169 = vmatprep.subr.bf16.mxu0 0
    %170 = vmatpush1.bf16.msra.mxu0 0
    %171 = vmatprep.subr.bf16.mxu0 0
    %172 = vmatpush1.bf16.msra.mxu0 0
    %173 = vmatprep.subr.bf16.mxu0 0
    %174 = vmatpush1.bf16.msra.mxu0 0
    %175 = vmatprep.mubr.bf16.mxu0 0
    %176 = vmatmul.mubr.bf16.gmra.mrb[0].mxu0 %v141
    %v177 = vpop.f32.mrb[0].mxu0
    %v178 = vadd.f32 %v126, %v177
    %v179 = vpop.f32.mrb[0].mxu0
    %v180 = vpop.f32.mrb[0].mxu0
    %v181 = vadd.f32 %v126, %v180
    %v182 = vpop.f32.mrb[0].mxu0
    %183 = vdwg.mxu0
    %v184 = vsub.f32 0.0, %v178
    %v185 = vsub.f32 0.0, %v181
    %v186 = vmul.f32 %v184, 1.442695
    %v187 = vpow.pop %v186
    %v188 = vmul.f32 %v185, 1.442695
    %v189 = vpow.pop %v188
    %v190 = vadd.f32 %v187, 1.0
    %v191 = vadd.f32 %v189, 1.0
    %v192 = vrcp.pop %v190
    %v193 = vrcp.pop %v191
    %v194 = vpack.c.bf16 %v193, %v192
    %v195 = vld [vmem:[%s5] sm:$0xf]
    %v196 = vld [vmem:[%s5 + $0x4] sm:$0xf]
    %v197 = vld [vmem:[%s6] sm:$0x1]
    %v199 = vlaneseq
    %v200 = vshrl.u32 %v199, 7
    %v201 = vsub.s32 0, %v200
    %v202 = vrot.slane %v197, %v201
    %v206 = vunpack.c.l.b16 %v195
    %v207 = vunpack.c.l.b16 %v196
    %v208 = vpack.c.b16 %v207, %v206
    %vm210 = vcmask 130048
    %v212 = vsel %vm210, %v194, 0
    %214 = vmatprep.subr.bf16.mxu0 0
    %215 = vmatpush1.bf16.msra.mxu0 %v208
    %216 = vmatprep.subr.bf16.mxu0 0
    %217 = vmatpush1.bf16.msra.mxu0 0
    %218 = vmatprep.subr.bf16.mxu0 0
    %219 = vmatpush1.bf16.msra.mxu0 0
    %220 = vmatprep.subr.bf16.mxu0 0
    %221 = vmatpush1.bf16.msra.mxu0 0
    %222 = vmatprep.subr.bf16.mxu0 0
    %223 = vmatpush1.bf16.msra.mxu0 0
    %224 = vmatprep.subr.bf16.mxu0 0
    %225 = vmatpush1.bf16.msra.mxu0 0
    %226 = vmatprep.subr.bf16.mxu0 0
    %227 = vmatpush1.bf16.msra.mxu0 0
    %228 = vmatprep.subr.bf16.mxu0 0
    %229 = vmatpush1.bf16.msra.mxu0 0
    %230 = vmatprep.subr.bf16.mxu0 0
    %231 = vmatpush1.bf16.msra.mxu0 0
    %232 = vmatprep.subr.bf16.mxu0 0
    %233 = vmatpush1.bf16.msra.mxu0 0
    %234 = vmatprep.subr.bf16.mxu0 0
    %235 = vmatpush1.bf16.msra.mxu0 0
    %236 = vmatprep.subr.bf16.mxu0 0
    %237 = vmatpush1.bf16.msra.mxu0 0
    %238 = vmatprep.subr.bf16.mxu0 0
    %239 = vmatpush1.bf16.msra.mxu0 0
    %240 = vmatprep.subr.bf16.mxu0 0
    %241 = vmatpush1.bf16.msra.mxu0 0
    %242 = vmatprep.subr.bf16.mxu0 0
    %243 = vmatpush1.bf16.msra.mxu0 0
    %244 = vmatprep.subr.bf16.mxu0 0
    %245 = vmatpush1.bf16.msra.mxu0 0
    %246 = vmatprep.mubr.bf16.mxu0 0
    %247 = vmatmul.mubr.bf16.gmra.mrb[0].mxu0 %v212
    %v248 = vpop.f32.mrb[0].mxu0
    %v249 = vadd.f32 %v202, %v248
    %v250 = vpop.f32.mrb[0].mxu0
    %v251 = vpop.f32.mrb[0].mxu0
    %v252 = vadd.f32 %v202, %v251
    %v253 = vpop.f32.mrb[0].mxu0
    %254 = vdwg.mxu0
    %255 = vst.msk [vmem:[#allocation2] sm:$0xff] %vm210, %v192
    %256 = vst.msk [vmem:[#allocation2 + $0x8] sm:$0xff] %vm210, %v193
    %vm257 = vcmask 72704
    %258 = vst.msk [vmem:[#allocation4] sm:$0xff] %vm257, %v249
    %259 = vst.msk [vmem:[#allocation4 + $0x8] sm:$0xff] %vm257, %v252
    // Predicated region
    $region30: #{tpu_custom_call.1} parent=1 // pred_check
      _
    $region31: #{tpu_custom_call.1} parent=1 // pred_check_branch
      %261 = sbr.rel (0) target = $region33
    $region32: #{tpu_custom_call.1} parent=1 // pred_region
      %s263 = ssub.s32 256, 256
      %264 = vsyncadd [#allocation3], %s263
      %s265 = sshll.u32 [#allocation2], 4
      %s266 = int_to_ptr.vmem [resolvable:$true] %s265
      %271 = dma.vmem_to_hbm [thread:$0]  %s266, 256, %s7, [#allocation3], 128, 128, 8
    $region33: #{tpu_custom_call.1} parent=1 // pred_fallthru
      _
    // Predicated region
    $region34: #{tpu_custom_call.1} parent=1 // pred_check
      _
    $region35: #{tpu_custom_call.1} parent=1 // pred_check_branch
      %273 = sbr.rel (0) target = $region37
    $region36: #{tpu_custom_call.1} parent=1 // pred_region
      %s275 = ssub.s32 256, 256
      %276 = vsyncadd [#allocation5], %s275
      %s277 = sshll.u32 [#allocation4], 4
      %s278 = int_to_ptr.vmem [resolvable:$true] %s277
      %283 = dma.vmem_to_hbm [thread:$0]  %s278, 256, %s8, [#allocation5], 128, 128, 8
    $region37: #{tpu_custom_call.1} parent=1 // pred_fallthru
      _
    // Predicated region
    $region38: #{tpu_custom_call.1} parent=1 // pred_check
      _
    $region39: #{tpu_custom_call.1} parent=1 // pred_check_branch
      %285 = sbr.rel (0) target = $region41
    $region40: #{tpu_custom_call.1} parent=1 // pred_region
      %286 = dma.done [#allocation3], 256
    $region41: #{tpu_custom_call.1} parent=1 // pred_fallthru
      _
    // Predicated region
    $region42: #{tpu_custom_call.1} parent=1 // pred_check
      _
    $region43: #{tpu_custom_call.1} parent=1 // pred_check_branch
      %288 = sbr.rel (0) target = $region45
    $region44: #{tpu_custom_call.1} parent=1 // pred_region
      %289 = dma.done [#allocation5], 256
    $region45: #{tpu_custom_call.1} parent=1 // pred_fallthru
      _
    %290 = vsyncpa [#allocation3], 1
    %291 = vsyncpa [#allocation5], 1

</llo_original>
